<compile_context>
chip_gen: v5e
topology: v5e:2x2
jax: 0.10.0
libtpu: 0.0.40
codegen_flags: <defaults>
</compile_context>

<pallas_src>
import math
from functools import partial

import jax
import jax.numpy as jnp
from jax.experimental import pallas as pl
from jax.experimental.pallas import tpu as pltpu


# ----------------------------------------------------------------------------- kernel
def bilstm_last_fc_kernel(
    x_ref,        # (T*B, I)  time-major flattened input (row t*B + b = step t, batch b)
    wih_f_ref,    # (I, 4H)   forward input->gates, transposed, i/f/o cols pre-scaled 0.5
    wih_b_ref,    # (I, 4H)   backward input->gates, transposed, same pre-scaling
    bf_ref,       # (1, 4H)   forward combined bias (b_ih + b_hh), pre-scaled
    bb_ref,       # (1, 4H)   backward combined bias, pre-scaled
    whh_f_ref,    # (H, 4H)   forward hidden->gates, transposed, pre-scaled (f32 or bf16)
    wfc_f_ref,    # (H, O)    fc weight slice acting on the forward half (transposed)
    wfc_b_ref,    # (H, O)    fc weight slice acting on the backward half (transposed)
    bfc_ref,      # (1, O)    fc bias
    out_ref,      # (B, O)    output
    *,
    T, B, H,
):
    H4 = 4 * H
    wih_f = wih_f_ref[...]
    bf = bf_ref[...]
    whh = whh_f_ref[...]          # loop-invariant recurrent weight, hoisted once

    # Because the i/f/o gate columns of every weight/bias were pre-scaled by 0.5,
    # sigmoid(z) = 0.5*tanh(z/2) + 0.5 becomes a plain tanh on the scaled gates:
    # ONE EUP push covers all four gates of a step.
    def cell_from_zero(gates):
        # Entering with h = c = 0: recurrent matmul and f*c vanish exactly.
        t = jnp.tanh(gates)
        i = t[:, 0:H] * 0.5 + 0.5
        g = t[:, 2 * H:3 * H]
        o = t[:, 3 * H:4 * H] * 0.5 + 0.5
        c_new = i * g
        h_new = o * jnp.tanh(c_new)
        return h_new, c_new

    def cell(gates, c):
        t = jnp.tanh(gates)
        i = t[:, 0:H] * 0.5 + 0.5
        f = t[:, H:2 * H] * 0.5 + 0.5
        g = t[:, 2 * H:3 * H]
        o = t[:, 3 * H:4 * H] * 0.5 + 0.5
        c_new = f * c + i * g
        h_new = o * jnp.tanh(c_new)
        return h_new, c_new

    # Step-0 forward gates: tiny (B, I) @ (I, 4H) issued first, so the serialized
    # recurrence can begin while the bulk projection below drains the MXU FIFO.
    g0 = jnp.dot(x_ref[0:B, :], wih_f, preferred_element_type=jnp.float32) + bf
    h, c = cell_from_zero(g0)

    if T > 1:
        # Bulk forward projection for steps 1..T-1 (forward weights only — no wasted
        # backward columns), biases folded in once.  Off the serial critical path.
        xg = (
            jnp.dot(x_ref[B:T * B, :], wih_f, preferred_element_type=jnp.float32)
            + bf
        )  # ((T-1)*B, 4H)

        # Fully unrolled recurrence (T static): only the small h @ w_hh dot per step.
        for t_idx in range(1, T):
            rec = jnp.dot(
                h.astype(whh.dtype), whh, preferred_element_type=jnp.float32
            )  # single MXU pass per step when whh is bf16; exact multi-pass when f32
            gates = xg[(t_idx - 1) * B:t_idx * B, 0:H4] + rec
            h, c = cell(gates, c)
    h_fwd = h

    # Backward direction at the LAST output position: one cell step on x[T-1] from
    # zero state — its own tiny input projection, never computed for other steps.
    gb = (
        jnp.dot(x_ref[(T - 1) * B:T * B, :], wih_b_ref[...],
                preferred_element_type=jnp.float32)
        + bb_ref[...]
    )
    h_bwd, _ = cell_from_zero(gb)

    # fc on concat([h_fwd, h_bwd]) without an explicit lane concat.
    y = (
        jnp.dot(h_fwd, wfc_f_ref[...], preferred_element_type=jnp.float32)
        + jnp.dot(h_bwd, wfc_b_ref[...], preferred_element_type=jnp.float32)
        + bfc_ref[...]
    )
    out_ref[...] = y.astype(out_ref.dtype)


# ----------------------------------------------------------------------------- param prep (run ONCE, outside the per-call path)
def prepare_params(params, recurrent_dtype=jnp.float32):
    """Fuse / transpose / pre-scale the weights once.

    The i, f, o gate columns are scaled by 0.5 (exact in f32 and bf16) so the kernel
    can evaluate all gate sigmoids with a single tanh.  `recurrent_dtype=bf16` casts
    the recurrent weight for a single-pass MXU matmul per step (f32 accumulation).
    """
    H = params["w_hh_f"].shape[1]
    scale = jnp.concatenate(
        [jnp.full((2 * H,), 0.5, jnp.float32),   # i, f
         jnp.ones((H,), jnp.float32),            # g
         jnp.full((H,), 0.5, jnp.float32)]       # o
    )                                                                   # (4H,)

    def scaled_t(w):   # (4H, K) -> (K, 4H), gate columns scaled
        return w.T.astype(jnp.float32) * scale[None, :]

    return {
        "wih_f": scaled_t(params["w_ih_f"]),                            # (I, 4H)
        "wih_b": scaled_t(params["w_ih_b"]),                            # (I, 4H)
        "bf": (scale * (params["b_ih_f"] + params["b_hh_f"]))[None].astype(jnp.float32),
        "bb": (scale * (params["b_ih_b"] + params["b_hh_b"]))[None].astype(jnp.float32),
        "whh_f": scaled_t(params["w_hh_f"]).astype(recurrent_dtype),    # (H, 4H)
        # w_hh_b is not needed — the backward cell's recurrent term is exactly 0.
        "wfc_f": params["w_fc"][:, :H].T.astype(jnp.float32),           # (H, O)
        "wfc_b": params["w_fc"][:, H:].T.astype(jnp.float32),           # (H, O)
        "bfc": params["b_fc"][None].astype(jnp.float32),                # (1, O)
    }


# ----------------------------------------------------------------------------- wrapper
def my_rnn_forward(x, prepped):
    """x: (B, T, I) float32, batch_first (same layout as the PyTorch module)."""
    B, T, I = x.shape
    H = prepped["whh_f"].shape[0]
    O = prepped["bfc"].shape[1]

    # Time-major flatten (row t*B + b).  Negligible at this size; for production
    # sizes this becomes the streamed-x BlockSpec index_map instead.
    x2d = jnp.transpose(x, (1, 0, 2)).reshape(T * B, I).astype(jnp.float32)

    vmem = pl.BlockSpec(memory_space=pltpu.MemorySpace.VMEM)
    kernel = partial(bilstm_last_fc_kernel, T=T, B=B, H=H)
    return pl.pallas_call(
        kernel,
        out_shape=jax.ShapeDtypeStruct((B, O), jnp.float32),
        in_specs=[vmem] * 9,
        out_specs=vmem,
    )(x2d, prepped["wih_f"], prepped["wih_b"], prepped["bf"], prepped["bb"],
      prepped["whh_f"], prepped["wfc_f"], prepped["wfc_b"], prepped["bfc"])


# ----------------------------------------------------------------------------- params
def init_params(key, input_size, hidden_dim, output_size):
    """Deterministic init matching the PyTorch module's parameter shapes/scales."""
    ks = jax.random.split(key, 11)
    stdv = 1.0 / math.sqrt(hidden_dim)          # nn.LSTM default
    stdv_fc = 1.0 / math.sqrt(2 * hidden_dim)   # nn.Linear default

    def u(k, shape, s):
        return jax.random.uniform(k, shape, jnp.float32, minval=-s, maxval=s)

    H4 = 4 * hidden_dim
    return {
        # forward direction
        "w_ih_f": u(ks[0], (H4, input_size), stdv),
        "w_hh_f": u(ks[1], (H4, hidden_dim), stdv),
        "b_ih_f": u(ks[2], (H4,), stdv),
        "b_hh_f": u(ks[3], (H4,), stdv),
        # backward direction
        "w_ih_b": u(ks[4], (H4, input_size), stdv),
        "w_hh_b": u(ks[5], (H4, hidden_dim), stdv),
        "b_ih_b": u(ks[6], (H4,), stdv),
        "b_hh_b": u(ks[7], (H4,), stdv),
        # fc
        "w_fc": u(ks[8], (output_size, 2 * hidden_dim), stdv_fc),
        "b_fc": u(ks[9], (output_size,), stdv_fc),
    }


# ----------------------------------------------------------------------------- reference
def reference_forward(x, params):
    """Pure-JAX reference of the same PyTorch semantics (for verification)."""
    B, T, I = x.shape
    H = params["w_hh_f"].shape[1]

    def cell(x_t, h, c, w_ih, w_hh, b_ih, b_hh):
        gates = x_t @ w_ih.T + h @ w_hh.T + b_ih + b_hh
        i = jax.nn.sigmoid(gates[:, :H])
        f = jax.nn.sigmoid(gates[:, H:2 * H])
        g = jnp.tanh(gates[:, 2 * H:3 * H])
        o = jax.nn.sigmoid(gates[:, 3 * H:])
        c = f * c + i * g
        return o * jnp.tanh(c), c

    h = jnp.zeros((B, H)); c = jnp.zeros((B, H))
    for t in range(T):
        h, c = cell(x[:, t], h, c, params["w_ih_f"], params["w_hh_f"],
                    params["b_ih_f"], params["b_hh_f"])
    h_fwd = h
    h_bwd, _ = cell(x[:, T - 1], jnp.zeros((B, H)), jnp.zeros((B, H)),
                    params["w_ih_b"], params["w_hh_b"],
                    params["b_ih_b"], params["b_hh_b"])
    feat = jnp.concatenate([h_fwd, h_bwd], axis=1)
    return feat @ params["w_fc"].T + params["b_fc"]


# ----------------------------------------------------------------------------- main
if __name__ == "__main__":
    # Small shapes consistent with the module (input_size=4, output_size=2).
    B, T, I, H, O = 8, 8, 4, 32, 2

    key = jax.random.PRNGKey(0)
    k_x, k_p = jax.random.split(key)
    x = jax.random.normal(k_x, (B, T, I), jnp.float32)
    params = init_params(k_p, I, H, O)

    ref = reference_forward(x, params)
    fwd = jax.jit(my_rnn_forward)

    # Exact path (f32 recurrent matmul): tight check against the pure-JAX reference.
    prepped = prepare_params(params)                       # one-time weight prep
    out = jax.block_until_ready(fwd(x, prepped))
    assert out.shape == (B, O), out.shape
    assert jnp.allclose(out, ref, atol=1e-4, rtol=1e-4), (
        float(jnp.max(jnp.abs(out - ref)))
    )

    # Fast path from the perf review: bf16 operands for the serialized recurrent
    # matmul (single MXU pass per unrolled step, f32 accumulation).  Checked at a
    # mixed-precision tolerance.
    prepped_bf16 = prepare_params(params, recurrent_dtype=jnp.bfloat16)
    out_fast = jax.block_until_ready(fwd(x, prepped_bf16))
    assert out_fast.shape == (B, O), out_fast.shape
    assert jnp.allclose(out_fast, ref, atol=5e-3, rtol=5e-3), (
        float(jnp.max(jnp.abs(out_fast - ref)))
    )

    print("KERNEL_OK")
</pallas_src>

<mosaic_0001>
module attributes {stable_mosaic.version = 11 : i64} {
  func.func @bilstm_last_fc_kernel(%arg0: memref<64x4xf32, #tpu.memory_space<vmem>>, %arg1: memref<4x128xf32, #tpu.memory_space<vmem>>, %arg2: memref<4x128xf32, #tpu.memory_space<vmem>>, %arg3: memref<1x128xf32, #tpu.memory_space<vmem>>, %arg4: memref<1x128xf32, #tpu.memory_space<vmem>>, %arg5: memref<32x128xf32, #tpu.memory_space<vmem>>, %arg6: memref<32x2xf32, #tpu.memory_space<vmem>>, %arg7: memref<32x2xf32, #tpu.memory_space<vmem>>, %arg8: memref<1x2xf32, #tpu.memory_space<vmem>>, %arg9: memref<8x2xf32, #tpu.memory_space<vmem>>) attributes {dimension_semantics = [], scalar_prefetch = 0 : i64, scratch_operands = 0 : i64, tpu.core_type = #tpu.core_type<tc>} {
    %c0 = arith.constant 0 : index
    %c0_0 = arith.constant 0 : index
    %0 = vector.load %arg1[%c0, %c0_0] : memref<4x128xf32, #tpu.memory_space<vmem>>, vector<4x128xf32>
    %c0_1 = arith.constant 0 : index
    %c0_2 = arith.constant 0 : index
    %1 = vector.load %arg3[%c0_1, %c0_2] : memref<1x128xf32, #tpu.memory_space<vmem>>, vector<1x128xf32>
    %c0_3 = arith.constant 0 : index
    %c0_4 = arith.constant 0 : index
    %2 = vector.load %arg5[%c0_3, %c0_4] : memref<32x128xf32, #tpu.memory_space<vmem>>, vector<32x128xf32>
    %c0_5 = arith.constant 0 : index
    %c0_6 = arith.constant 0 : index
    %3 = vector.load %arg0[%c0_5, %c0_6] : memref<64x4xf32, #tpu.memory_space<vmem>>, vector<8x4xf32>
    %cst = arith.constant dense<0.000000e+00> : vector<8x128xf32>
    %4 = tpu.matmul %3, %0, %cst {dimension_numbers = #tpu.dot_dimension_numbers<[1], [0], [0], [1], [0, 0, 1, 1], [], []>} : vector<8x4xf32>, vector<4x128xf32>, vector<8x128xf32> -> vector<8x128xf32>
    %5 = vector.broadcast %1 : vector<1x128xf32> to vector<8x128xf32>
    %6 = arith.addf %4, %5 : vector<8x128xf32>
    %7 = math.tanh %6 : vector<8x128xf32>
    %8 = vector.extract_strided_slice %7 {offsets = [0, 0], sizes = [8, 32], strides = [1, 1]} : vector<8x128xf32> to vector<8x32xf32>
    %cst_7 = arith.constant 5.000000e-01 : f32
    %9 = vector.broadcast %cst_7 : f32 to vector<8x32xf32>
    %10 = arith.mulf %8, %9 : vector<8x32xf32>
    %cst_8 = arith.constant 5.000000e-01 : f32
    %11 = vector.broadcast %cst_8 : f32 to vector<8x32xf32>
    %12 = arith.addf %10, %11 : vector<8x32xf32>
    %13 = vector.extract_strided_slice %7 {offsets = [0, 64], sizes = [8, 32], strides = [1, 1]} : vector<8x128xf32> to vector<8x32xf32>
    %14 = vector.extract_strided_slice %7 {offsets = [0, 96], sizes = [8, 32], strides = [1, 1]} : vector<8x128xf32> to vector<8x32xf32>
    %cst_9 = arith.constant 5.000000e-01 : f32
    %15 = vector.broadcast %cst_9 : f32 to vector<8x32xf32>
    %16 = arith.mulf %14, %15 : vector<8x32xf32>
    %cst_10 = arith.constant 5.000000e-01 : f32
    %17 = vector.broadcast %cst_10 : f32 to vector<8x32xf32>
    %18 = arith.addf %16, %17 : vector<8x32xf32>
    %19 = arith.mulf %12, %13 : vector<8x32xf32>
    %20 = math.tanh %19 : vector<8x32xf32>
    %21 = arith.mulf %18, %20 : vector<8x32xf32>
    %c8 = arith.constant 8 : index
    %c0_11 = arith.constant 0 : index
    %22 = vector.load %arg0[%c8, %c0_11] : memref<64x4xf32, #tpu.memory_space<vmem>>, vector<56x4xf32>
    %cst_12 = arith.constant dense<0.000000e+00> : vector<56x128xf32>
    %23 = tpu.matmul %22, %0, %cst_12 {dimension_numbers = #tpu.dot_dimension_numbers<[1], [0], [0], [1], [0, 0, 1, 1], [], []>} : vector<56x4xf32>, vector<4x128xf32>, vector<56x128xf32> -> vector<56x128xf32>
    %24 = vector.broadcast %1 : vector<1x128xf32> to vector<56x128xf32>
    %25 = arith.addf %23, %24 : vector<56x128xf32>
    %cst_13 = arith.constant dense<0.000000e+00> : vector<8x128xf32>
    %26 = tpu.matmul %21, %2, %cst_13 {dimension_numbers = #tpu.dot_dimension_numbers<[1], [0], [0], [1], [0, 0, 1, 1], [], []>} : vector<8x32xf32>, vector<32x128xf32>, vector<8x128xf32> -> vector<8x128xf32>
    %27 = vector.extract_strided_slice %25 {offsets = [0, 0], sizes = [8, 128], strides = [1, 1]} : vector<56x128xf32> to vector<8x128xf32>
    %28 = arith.addf %27, %26 : vector<8x128xf32>
    %29 = math.tanh %28 : vector<8x128xf32>
    %30 = vector.extract_strided_slice %29 {offsets = [0, 0], sizes = [8, 32], strides = [1, 1]} : vector<8x128xf32> to vector<8x32xf32>
    %cst_14 = arith.constant 5.000000e-01 : f32
    %31 = vector.broadcast %cst_14 : f32 to vector<8x32xf32>
    %32 = arith.mulf %30, %31 : vector<8x32xf32>
    %cst_15 = arith.constant 5.000000e-01 : f32
    %33 = vector.broadcast %cst_15 : f32 to vector<8x32xf32>
    %34 = arith.addf %32, %33 : vector<8x32xf32>
    %35 = vector.extract_strided_slice %29 {offsets = [0, 32], sizes = [8, 32], strides = [1, 1]} : vector<8x128xf32> to vector<8x32xf32>
    %cst_16 = arith.constant 5.000000e-01 : f32
    %36 = vector.broadcast %cst_16 : f32 to vector<8x32xf32>
    %37 = arith.mulf %35, %36 : vector<8x32xf32>
    %cst_17 = arith.constant 5.000000e-01 : f32
    %38 = vector.broadcast %cst_17 : f32 to vector<8x32xf32>
    %39 = arith.addf %37, %38 : vector<8x32xf32>
    %40 = vector.extract_strided_slice %29 {offsets = [0, 64], sizes = [8, 32], strides = [1, 1]} : vector<8x128xf32> to vector<8x32xf32>
    %41 = vector.extract_strided_slice %29 {offsets = [0, 96], sizes = [8, 32], strides = [1, 1]} : vector<8x128xf32> to vector<8x32xf32>
    %cst_18 = arith.constant 5.000000e-01 : f32
    %42 = vector.broadcast %cst_18 : f32 to vector<8x32xf32>
    %43 = arith.mulf %41, %42 : vector<8x32xf32>
    %cst_19 = arith.constant 5.000000e-01 : f32
    %44 = vector.broadcast %cst_19 : f32 to vector<8x32xf32>
    %45 = arith.addf %43, %44 : vector<8x32xf32>
    %46 = arith.mulf %39, %19 : vector<8x32xf32>
    %47 = arith.mulf %34, %40 : vector<8x32xf32>
    %48 = arith.addf %46, %47 : vector<8x32xf32>
    %49 = math.tanh %48 : vector<8x32xf32>
    %50 = arith.mulf %45, %49 : vector<8x32xf32>
    %cst_20 = arith.constant dense<0.000000e+00> : vector<8x128xf32>
    %51 = tpu.matmul %50, %2, %cst_20 {dimension_numbers = #tpu.dot_dimension_numbers<[1], [0], [0], [1], [0, 0, 1, 1], [], []>} : vector<8x32xf32>, vector<32x128xf32>, vector<8x128xf32> -> vector<8x128xf32>
    %52 = vector.extract_strided_slice %25 {offsets = [8, 0], sizes = [8, 128], strides = [1, 1]} : vector<56x128xf32> to vector<8x128xf32>
    %53 = arith.addf %52, %51 : vector<8x128xf32>
    %54 = math.tanh %53 : vector<8x128xf32>
    %55 = vector.extract_strided_slice %54 {offsets = [0, 0], sizes = [8, 32], strides = [1, 1]} : vector<8x128xf32> to vector<8x32xf32>
    %cst_21 = arith.constant 5.000000e-01 : f32
    %56 = vector.broadcast %cst_21 : f32 to vector<8x32xf32>
    %57 = arith.mulf %55, %56 : vector<8x32xf32>
    %cst_22 = arith.constant 5.000000e-01 : f32
    %58 = vector.broadcast %cst_22 : f32 to vector<8x32xf32>
    %59 = arith.addf %57, %58 : vector<8x32xf32>
    %60 = vector.extract_strided_slice %54 {offsets = [0, 32], sizes = [8, 32], strides = [1, 1]} : vector<8x128xf32> to vector<8x32xf32>
    %cst_23 = arith.constant 5.000000e-01 : f32
    %61 = vector.broadcast %cst_23 : f32 to vector<8x32xf32>
    %62 = arith.mulf %60, %61 : vector<8x32xf32>
    %cst_24 = arith.constant 5.000000e-01 : f32
    %63 = vector.broadcast %cst_24 : f32 to vector<8x32xf32>
    %64 = arith.addf %62, %63 : vector<8x32xf32>
    %65 = vector.extract_strided_slice %54 {offsets = [0, 64], sizes = [8, 32], strides = [1, 1]} : vector<8x128xf32> to vector<8x32xf32>
    %66 = vector.extract_strided_slice %54 {offsets = [0, 96], sizes = [8, 32], strides = [1, 1]} : vector<8x128xf32> to vector<8x32xf32>
    %cst_25 = arith.constant 5.000000e-01 : f32
    %67 = vector.broadcast %cst_25 : f32 to vector<8x32xf32>
    %68 = arith.mulf %66, %67 : vector<8x32xf32>
    %cst_26 = arith.constant 5.000000e-01 : f32
    %69 = vector.broadcast %cst_26 : f32 to vector<8x32xf32>
    %70 = arith.addf %68, %69 : vector<8x32xf32>
    %71 = arith.mulf %64, %48 : vector<8x32xf32>
    %72 = arith.mulf %59, %65 : vector<8x32xf32>
    %73 = arith.addf %71, %72 : vector<8x32xf32>
    %74 = math.tanh %73 : vector<8x32xf32>
    %75 = arith.mulf %70, %74 : vector<8x32xf32>
    %cst_27 = arith.constant dense<0.000000e+00> : vector<8x128xf32>
    %76 = tpu.matmul %75, %2, %cst_27 {dimension_numbers = #tpu.dot_dimension_numbers<[1], [0], [0], [1], [0, 0, 1, 1], [], []>} : vector<8x32xf32>, vector<32x128xf32>, vector<8x128xf32> -> vector<8x128xf32>
    %77 = vector.extract_strided_slice %25 {offsets = [16, 0], sizes = [8, 128], strides = [1, 1]} : vector<56x128xf32> to vector<8x128xf32>
    %78 = arith.addf %77, %76 : vector<8x128xf32>
    %79 = math.tanh %78 : vector<8x128xf32>
    %80 = vector.extract_strided_slice %79 {offsets = [0, 0], sizes = [8, 32], strides = [1, 1]} : vector<8x128xf32> to vector<8x32xf32>
    %cst_28 = arith.constant 5.000000e-01 : f32
    %81 = vector.broadcast %cst_28 : f32 to vector<8x32xf32>
    %82 = arith.mulf %80, %81 : vector<8x32xf32>
    %cst_29 = arith.constant 5.000000e-01 : f32
    %83 = vector.broadcast %cst_29 : f32 to vector<8x32xf32>
    %84 = arith.addf %82, %83 : vector<8x32xf32>
    %85 = vector.extract_strided_slice %79 {offsets = [0, 32], sizes = [8, 32], strides = [1, 1]} : vector<8x128xf32> to vector<8x32xf32>
    %cst_30 = arith.constant 5.000000e-01 : f32
    %86 = vector.broadcast %cst_30 : f32 to vector<8x32xf32>
    %87 = arith.mulf %85, %86 : vector<8x32xf32>
    %cst_31 = arith.constant 5.000000e-01 : f32
    %88 = vector.broadcast %cst_31 : f32 to vector<8x32xf32>
    %89 = arith.addf %87, %88 : vector<8x32xf32>
    %90 = vector.extract_strided_slice %79 {offsets = [0, 64], sizes = [8, 32], strides = [1, 1]} : vector<8x128xf32> to vector<8x32xf32>
    %91 = vector.extract_strided_slice %79 {offsets = [0, 96], sizes = [8, 32], strides = [1, 1]} : vector<8x128xf32> to vector<8x32xf32>
    %cst_32 = arith.constant 5.000000e-01 : f32
    %92 = vector.broadcast %cst_32 : f32 to vector<8x32xf32>
    %93 = arith.mulf %91, %92 : vector<8x32xf32>
    %cst_33 = arith.constant 5.000000e-01 : f32
    %94 = vector.broadcast %cst_33 : f32 to vector<8x32xf32>
    %95 = arith.addf %93, %94 : vector<8x32xf32>
    %96 = arith.mulf %89, %73 : vector<8x32xf32>
    %97 = arith.mulf %84, %90 : vector<8x32xf32>
    %98 = arith.addf %96, %97 : vector<8x32xf32>
    %99 = math.tanh %98 : vector<8x32xf32>
    %100 = arith.mulf %95, %99 : vector<8x32xf32>
    %cst_34 = arith.constant dense<0.000000e+00> : vector<8x128xf32>
    %101 = tpu.matmul %100, %2, %cst_34 {dimension_numbers = #tpu.dot_dimension_numbers<[1], [0], [0], [1], [0, 0, 1, 1], [], []>} : vector<8x32xf32>, vector<32x128xf32>, vector<8x128xf32> -> vector<8x128xf32>
    %102 = vector.extract_strided_slice %25 {offsets = [24, 0], sizes = [8, 128], strides = [1, 1]} : vector<56x128xf32> to vector<8x128xf32>
    %103 = arith.addf %102, %101 : vector<8x128xf32>
    %104 = math.tanh %103 : vector<8x128xf32>
    %105 = vector.extract_strided_slice %104 {offsets = [0, 0], sizes = [8, 32], strides = [1, 1]} : vector<8x128xf32> to vector<8x32xf32>
    %cst_35 = arith.constant 5.000000e-01 : f32
    %106 = vector.broadcast %cst_35 : f32 to vector<8x32xf32>
    %107 = arith.mulf %105, %106 : vector<8x32xf32>
    %cst_36 = arith.constant 5.000000e-01 : f32
    %108 = vector.broadcast %cst_36 : f32 to vector<8x32xf32>
    %109 = arith.addf %107, %108 : vector<8x32xf32>
    %110 = vector.extract_strided_slice %104 {offsets = [0, 32], sizes = [8, 32], strides = [1, 1]} : vector<8x128xf32> to vector<8x32xf32>
    %cst_37 = arith.constant 5.000000e-01 : f32
    %111 = vector.broadcast %cst_37 : f32 to vector<8x32xf32>
    %112 = arith.mulf %110, %111 : vector<8x32xf32>
    %cst_38 = arith.constant 5.000000e-01 : f32
    %113 = vector.broadcast %cst_38 : f32 to vector<8x32xf32>
    %114 = arith.addf %112, %113 : vector<8x32xf32>
    %115 = vector.extract_strided_slice %104 {offsets = [0, 64], sizes = [8, 32], strides = [1, 1]} : vector<8x128xf32> to vector<8x32xf32>
    %116 = vector.extract_strided_slice %104 {offsets = [0, 96], sizes = [8, 32], strides = [1, 1]} : vector<8x128xf32> to vector<8x32xf32>
    %cst_39 = arith.constant 5.000000e-01 : f32
    %117 = vector.broadcast %cst_39 : f32 to vector<8x32xf32>
    %118 = arith.mulf %116, %117 : vector<8x32xf32>
    %cst_40 = arith.constant 5.000000e-01 : f32
    %119 = vector.broadcast %cst_40 : f32 to vector<8x32xf32>
    %120 = arith.addf %118, %119 : vector<8x32xf32>
    %121 = arith.mulf %114, %98 : vector<8x32xf32>
    %122 = arith.mulf %109, %115 : vector<8x32xf32>
    %123 = arith.addf %121, %122 : vector<8x32xf32>
    %124 = math.tanh %123 : vector<8x32xf32>
    %125 = arith.mulf %120, %124 : vector<8x32xf32>
    %cst_41 = arith.constant dense<0.000000e+00> : vector<8x128xf32>
    %126 = tpu.matmul %125, %2, %cst_41 {dimension_numbers = #tpu.dot_dimension_numbers<[1], [0], [0], [1], [0, 0, 1, 1], [], []>} : vector<8x32xf32>, vector<32x128xf32>, vector<8x128xf32> -> vector<8x128xf32>
    %127 = vector.extract_strided_slice %25 {offsets = [32, 0], sizes = [8, 128], strides = [1, 1]} : vector<56x128xf32> to vector<8x128xf32>
    %128 = arith.addf %127, %126 : vector<8x128xf32>
    %129 = math.tanh %128 : vector<8x128xf32>
    %130 = vector.extract_strided_slice %129 {offsets = [0, 0], sizes = [8, 32], strides = [1, 1]} : vector<8x128xf32> to vector<8x32xf32>
    %cst_42 = arith.constant 5.000000e-01 : f32
    %131 = vector.broadcast %cst_42 : f32 to vector<8x32xf32>
    %132 = arith.mulf %130, %131 : vector<8x32xf32>
    %cst_43 = arith.constant 5.000000e-01 : f32
    %133 = vector.broadcast %cst_43 : f32 to vector<8x32xf32>
    %134 = arith.addf %132, %133 : vector<8x32xf32>
    %135 = vector.extract_strided_slice %129 {offsets = [0, 32], sizes = [8, 32], strides = [1, 1]} : vector<8x128xf32> to vector<8x32xf32>
    %cst_44 = arith.constant 5.000000e-01 : f32
    %136 = vector.broadcast %cst_44 : f32 to vector<8x32xf32>
    %137 = arith.mulf %135, %136 : vector<8x32xf32>
    %cst_45 = arith.constant 5.000000e-01 : f32
    %138 = vector.broadcast %cst_45 : f32 to vector<8x32xf32>
    %139 = arith.addf %137, %138 : vector<8x32xf32>
    %140 = vector.extract_strided_slice %129 {offsets = [0, 64], sizes = [8, 32], strides = [1, 1]} : vector<8x128xf32> to vector<8x32xf32>
    %141 = vector.extract_strided_slice %129 {offsets = [0, 96], sizes = [8, 32], strides = [1, 1]} : vector<8x128xf32> to vector<8x32xf32>
    %cst_46 = arith.constant 5.000000e-01 : f32
    %142 = vector.broadcast %cst_46 : f32 to vector<8x32xf32>
    %143 = arith.mulf %141, %142 : vector<8x32xf32>
    %cst_47 = arith.constant 5.000000e-01 : f32
    %144 = vector.broadcast %cst_47 : f32 to vector<8x32xf32>
    %145 = arith.addf %143, %144 : vector<8x32xf32>
    %146 = arith.mulf %139, %123 : vector<8x32xf32>
    %147 = arith.mulf %134, %140 : vector<8x32xf32>
    %148 = arith.addf %146, %147 : vector<8x32xf32>
    %149 = math.tanh %148 : vector<8x32xf32>
    %150 = arith.mulf %145, %149 : vector<8x32xf32>
    %cst_48 = arith.constant dense<0.000000e+00> : vector<8x128xf32>
    %151 = tpu.matmul %150, %2, %cst_48 {dimension_numbers = #tpu.dot_dimension_numbers<[1], [0], [0], [1], [0, 0, 1, 1], [], []>} : vector<8x32xf32>, vector<32x128xf32>, vector<8x128xf32> -> vector<8x128xf32>
    %152 = vector.extract_strided_slice %25 {offsets = [40, 0], sizes = [8, 128], strides = [1, 1]} : vector<56x128xf32> to vector<8x128xf32>
    %153 = arith.addf %152, %151 : vector<8x128xf32>
    %154 = math.tanh %153 : vector<8x128xf32>
    %155 = vector.extract_strided_slice %154 {offsets = [0, 0], sizes = [8, 32], strides = [1, 1]} : vector<8x128xf32> to vector<8x32xf32>
    %cst_49 = arith.constant 5.000000e-01 : f32
    %156 = vector.broadcast %cst_49 : f32 to vector<8x32xf32>
    %157 = arith.mulf %155, %156 : vector<8x32xf32>
    %cst_50 = arith.constant 5.000000e-01 : f32
    %158 = vector.broadcast %cst_50 : f32 to vector<8x32xf32>
    %159 = arith.addf %157, %158 : vector<8x32xf32>
    %160 = vector.extract_strided_slice %154 {offsets = [0, 32], sizes = [8, 32], strides = [1, 1]} : vector<8x128xf32> to vector<8x32xf32>
    %cst_51 = arith.constant 5.000000e-01 : f32
    %161 = vector.broadcast %cst_51 : f32 to vector<8x32xf32>
    %162 = arith.mulf %160, %161 : vector<8x32xf32>
    %cst_52 = arith.constant 5.000000e-01 : f32
    %163 = vector.broadcast %cst_52 : f32 to vector<8x32xf32>
    %164 = arith.addf %162, %163 : vector<8x32xf32>
    %165 = vector.extract_strided_slice %154 {offsets = [0, 64], sizes = [8, 32], strides = [1, 1]} : vector<8x128xf32> to vector<8x32xf32>
    %166 = vector.extract_strided_slice %154 {offsets = [0, 96], sizes = [8, 32], strides = [1, 1]} : vector<8x128xf32> to vector<8x32xf32>
    %cst_53 = arith.constant 5.000000e-01 : f32
    %167 = vector.broadcast %cst_53 : f32 to vector<8x32xf32>
    %168 = arith.mulf %166, %167 : vector<8x32xf32>
    %cst_54 = arith.constant 5.000000e-01 : f32
    %169 = vector.broadcast %cst_54 : f32 to vector<8x32xf32>
    %170 = arith.addf %168, %169 : vector<8x32xf32>
    %171 = arith.mulf %164, %148 : vector<8x32xf32>
    %172 = arith.mulf %159, %165 : vector<8x32xf32>
    %173 = arith.addf %171, %172 : vector<8x32xf32>
    %174 = math.tanh %173 : vector<8x32xf32>
    %175 = arith.mulf %170, %174 : vector<8x32xf32>
    %cst_55 = arith.constant dense<0.000000e+00> : vector<8x128xf32>
    %176 = tpu.matmul %175, %2, %cst_55 {dimension_numbers = #tpu.dot_dimension_numbers<[1], [0], [0], [1], [0, 0, 1, 1], [], []>} : vector<8x32xf32>, vector<32x128xf32>, vector<8x128xf32> -> vector<8x128xf32>
    %177 = vector.extract_strided_slice %25 {offsets = [48, 0], sizes = [8, 128], strides = [1, 1]} : vector<56x128xf32> to vector<8x128xf32>
    %178 = arith.addf %177, %176 : vector<8x128xf32>
    %179 = math.tanh %178 : vector<8x128xf32>
    %180 = vector.extract_strided_slice %179 {offsets = [0, 0], sizes = [8, 32], strides = [1, 1]} : vector<8x128xf32> to vector<8x32xf32>
    %cst_56 = arith.constant 5.000000e-01 : f32
    %181 = vector.broadcast %cst_56 : f32 to vector<8x32xf32>
    %182 = arith.mulf %180, %181 : vector<8x32xf32>
    %cst_57 = arith.constant 5.000000e-01 : f32
    %183 = vector.broadcast %cst_57 : f32 to vector<8x32xf32>
    %184 = arith.addf %182, %183 : vector<8x32xf32>
    %185 = vector.extract_strided_slice %179 {offsets = [0, 32], sizes = [8, 32], strides = [1, 1]} : vector<8x128xf32> to vector<8x32xf32>
    %cst_58 = arith.constant 5.000000e-01 : f32
    %186 = vector.broadcast %cst_58 : f32 to vector<8x32xf32>
    %187 = arith.mulf %185, %186 : vector<8x32xf32>
    %cst_59 = arith.constant 5.000000e-01 : f32
    %188 = vector.broadcast %cst_59 : f32 to vector<8x32xf32>
    %189 = arith.addf %187, %188 : vector<8x32xf32>
    %190 = vector.extract_strided_slice %179 {offsets = [0, 64], sizes = [8, 32], strides = [1, 1]} : vector<8x128xf32> to vector<8x32xf32>
    %191 = vector.extract_strided_slice %179 {offsets = [0, 96], sizes = [8, 32], strides = [1, 1]} : vector<8x128xf32> to vector<8x32xf32>
    %cst_60 = arith.constant 5.000000e-01 : f32
    %192 = vector.broadcast %cst_60 : f32 to vector<8x32xf32>
    %193 = arith.mulf %191, %192 : vector<8x32xf32>
    %cst_61 = arith.constant 5.000000e-01 : f32
    %194 = vector.broadcast %cst_61 : f32 to vector<8x32xf32>
    %195 = arith.addf %193, %194 : vector<8x32xf32>
    %196 = arith.mulf %189, %173 : vector<8x32xf32>
    %197 = arith.mulf %184, %190 : vector<8x32xf32>
    %198 = arith.addf %196, %197 : vector<8x32xf32>
    %199 = math.tanh %198 : vector<8x32xf32>
    %200 = arith.mulf %195, %199 : vector<8x32xf32>
    %c56 = arith.constant 56 : index
    %c0_62 = arith.constant 0 : index
    %201 = vector.load %arg0[%c56, %c0_62] : memref<64x4xf32, #tpu.memory_space<vmem>>, vector<8x4xf32>
    %c0_63 = arith.constant 0 : index
    %c0_64 = arith.constant 0 : index
    %202 = vector.load %arg2[%c0_63, %c0_64] : memref<4x128xf32, #tpu.memory_space<vmem>>, vector<4x128xf32>
    %cst_65 = arith.constant dense<0.000000e+00> : vector<8x128xf32>
    %203 = tpu.matmul %201, %202, %cst_65 {dimension_numbers = #tpu.dot_dimension_numbers<[1], [0], [0], [1], [0, 0, 1, 1], [], []>} : vector<8x4xf32>, vector<4x128xf32>, vector<8x128xf32> -> vector<8x128xf32>
    %c0_66 = arith.constant 0 : index
    %c0_67 = arith.constant 0 : index
    %204 = vector.load %arg4[%c0_66, %c0_67] : memref<1x128xf32, #tpu.memory_space<vmem>>, vector<1x128xf32>
    %205 = vector.broadcast %204 : vector<1x128xf32> to vector<8x128xf32>
    %206 = arith.addf %203, %205 : vector<8x128xf32>
    %207 = math.tanh %206 : vector<8x128xf32>
    %208 = vector.extract_strided_slice %207 {offsets = [0, 0], sizes = [8, 32], strides = [1, 1]} : vector<8x128xf32> to vector<8x32xf32>
    %cst_68 = arith.constant 5.000000e-01 : f32
    %209 = vector.broadcast %cst_68 : f32 to vector<8x32xf32>
    %210 = arith.mulf %208, %209 : vector<8x32xf32>
    %cst_69 = arith.constant 5.000000e-01 : f32
    %211 = vector.broadcast %cst_69 : f32 to vector<8x32xf32>
    %212 = arith.addf %210, %211 : vector<8x32xf32>
    %213 = vector.extract_strided_slice %207 {offsets = [0, 64], sizes = [8, 32], strides = [1, 1]} : vector<8x128xf32> to vector<8x32xf32>
    %214 = vector.extract_strided_slice %207 {offsets = [0, 96], sizes = [8, 32], strides = [1, 1]} : vector<8x128xf32> to vector<8x32xf32>
    %cst_70 = arith.constant 5.000000e-01 : f32
    %215 = vector.broadcast %cst_70 : f32 to vector<8x32xf32>
    %216 = arith.mulf %214, %215 : vector<8x32xf32>
    %cst_71 = arith.constant 5.000000e-01 : f32
    %217 = vector.broadcast %cst_71 : f32 to vector<8x32xf32>
    %218 = arith.addf %216, %217 : vector<8x32xf32>
    %219 = arith.mulf %212, %213 : vector<8x32xf32>
    %220 = math.tanh %219 : vector<8x32xf32>
    %221 = arith.mulf %218, %220 : vector<8x32xf32>
    %c0_72 = arith.constant 0 : index
    %c0_73 = arith.constant 0 : index
    %222 = vector.load %arg6[%c0_72, %c0_73] : memref<32x2xf32, #tpu.memory_space<vmem>>, vector<32x2xf32>
    %cst_74 = arith.constant dense<0.000000e+00> : vector<8x2xf32>
    %223 = tpu.matmul %200, %222, %cst_74 {dimension_numbers = #tpu.dot_dimension_numbers<[1], [0], [0], [1], [0, 0, 1, 1], [], []>} : vector<8x32xf32>, vector<32x2xf32>, vector<8x2xf32> -> vector<8x2xf32>
    %c0_75 = arith.constant 0 : index
    %c0_76 = arith.constant 0 : index
    %224 = vector.load %arg7[%c0_75, %c0_76] : memref<32x2xf32, #tpu.memory_space<vmem>>, vector<32x2xf32>
    %cst_77 = arith.constant dense<0.000000e+00> : vector<8x2xf32>
    %225 = tpu.matmul %221, %224, %cst_77 {dimension_numbers = #tpu.dot_dimension_numbers<[1], [0], [0], [1], [0, 0, 1, 1], [], []>} : vector<8x32xf32>, vector<32x2xf32>, vector<8x2xf32> -> vector<8x2xf32>
    %226 = arith.addf %223, %225 : vector<8x2xf32>
    %c0_78 = arith.constant 0 : index
    %c0_79 = arith.constant 0 : index
    %227 = vector.load %arg8[%c0_78, %c0_79] : memref<1x2xf32, #tpu.memory_space<vmem>>, vector<1x2xf32>
    %228 = vector.broadcast %227 : vector<1x2xf32> to vector<8x2xf32>
    %229 = arith.addf %226, %228 : vector<8x2xf32>
    %c0_80 = arith.constant 0 : index
    %c0_81 = arith.constant 0 : index
    %230 = vector.load %arg9[%c0_80, %c0_81] : memref<8x2xf32, #tpu.memory_space<vmem>>, vector<8x2xf32>
    tpu.vector_store %arg9[%c0_80, %c0_81], %229 {strides = array<i32>} : memref<8x2xf32, #tpu.memory_space<vmem>>, vector<8x2xf32>,
    return
  }
}

</mosaic_0001>

<llo_original>
// kernel: my_rnn_forward.1
$region0: #{my_rnn_forward.1}
  #allocation0 [shape = 'u32[]', space=smem, size = 0x4, offset = 0x4, fixed_abs, tag = 'smem constant byte address 0x4 - core index']
  #allocation1 [shape = 'u32[72,128]{1,0:T(1,128)}', space=vmem, size = 0x9000, scoped, tag = 'internal scratch']
  %s0 = inlined_call_operand.vmem [shape: f32[64,4], index: 0, kind: input, shape index: {}]
  %s1 = inlined_call_operand.vmem [shape: f32[4,128], index: 1, kind: input, shape index: {}]
  %s2 = inlined_call_operand.vmem [shape: f32[4,128], index: 2, kind: input, shape index: {}]
  %s3 = inlined_call_operand.vmem [shape: f32[1,128], index: 3, kind: input, shape index: {}]
  %s4 = inlined_call_operand.vmem [shape: f32[1,128], index: 4, kind: input, shape index: {}]
  %s5 = inlined_call_operand.vmem [shape: f32[32,128], index: 5, kind: input, shape index: {}]
  %s6 = inlined_call_operand.vmem [shape: f32[32,2], index: 6, kind: input, shape index: {}]
  %s7 = inlined_call_operand.vmem [shape: f32[32,2], index: 7, kind: input, shape index: {}]
  %s8 = inlined_call_operand.vmem [shape: f32[1,2], index: 8, kind: input, shape index: {}]
  %s9 = inlined_call_operand.vmem [shape: f32[8,2], index: 9, kind: output, shape index: {}]
  %s10 = sld [smem:[#allocation0]]
  $region46: #{my_rnn_forward.1} parent=0
    _
  %s12 = ssub.s32 1, %s10
  %s13 = scalar_select 0, %s12, %s10
  // Predicated region
  $region2: #{my_rnn_forward.1} parent=0 // pred_check
    _
  $region3: #{my_rnn_forward.1} parent=0 // pred_check_branch
    %15 = sbr.rel (0) target = $region5
  $region4: #{my_rnn_forward.1} parent=0 // pred_region
    _
  $region5: #{my_rnn_forward.1} parent=0 // pred_fallthru
    _
  // Predicated region
  $region6: #{my_rnn_forward.1} parent=0 // pred_check
    _
  $region7: #{my_rnn_forward.1} parent=0 // pred_check_branch
    %17 = sbr.rel (0) target = $region9
  $region8: #{my_rnn_forward.1} parent=0 // pred_region
    _
  $region9: #{my_rnn_forward.1} parent=0 // pred_fallthru
    _
  // Predicated region
  $region10: #{my_rnn_forward.1} parent=0 // pred_check
    _
  $region11: #{my_rnn_forward.1} parent=0 // pred_check_branch
    %19 = sbr.rel (0) target = $region13
  $region12: #{my_rnn_forward.1} parent=0 // pred_region
    _
  $region13: #{my_rnn_forward.1} parent=0 // pred_fallthru
    _
  // Predicated region
  $region14: #{my_rnn_forward.1} parent=0 // pred_check
    _
  $region15: #{my_rnn_forward.1} parent=0 // pred_check_branch
    %21 = sbr.rel (0) target = $region17
  $region16: #{my_rnn_forward.1} parent=0 // pred_region
    _
  $region17: #{my_rnn_forward.1} parent=0 // pred_fallthru
    _
  // Predicated region
  $region18: #{my_rnn_forward.1} parent=0 // pred_check
    _
  $region19: #{my_rnn_forward.1} parent=0 // pred_check_branch
    %23 = sbr.rel (0) target = $region21
  $region20: #{my_rnn_forward.1} parent=0 // pred_region
    _
  $region21: #{my_rnn_forward.1} parent=0 // pred_fallthru
    _
  // Predicated region
  $region22: #{my_rnn_forward.1} parent=0 // pred_check
    _
  $region23: #{my_rnn_forward.1} parent=0 // pred_check_branch
    %25 = sbr.rel (0) target = $region25
  $region24: #{my_rnn_forward.1} parent=0 // pred_region
    _
  $region25: #{my_rnn_forward.1} parent=0 // pred_fallthru
    _
  // Predicated region
  $region26: #{my_rnn_forward.1} parent=0 // pred_check
    _
  $region27: #{my_rnn_forward.1} parent=0 // pred_check_branch
    %27 = sbr.rel (0) target = $region29
  $region28: #{my_rnn_forward.1} parent=0 // pred_region
    _
  $region29: #{my_rnn_forward.1} parent=0 // pred_fallthru
    _
  // Predicated region
  $region30: #{my_rnn_forward.1} parent=0 // pred_check
    _
  $region31: #{my_rnn_forward.1} parent=0 // pred_check_branch
    %29 = sbr.rel (0) target = $region33
  $region32: #{my_rnn_forward.1} parent=0 // pred_region
    _
  $region33: #{my_rnn_forward.1} parent=0 // pred_fallthru
    _
  // Predicated region
  $region34: #{my_rnn_forward.1} parent=0 // pred_check
    _
  $region35: #{my_rnn_forward.1} parent=0 // pred_check_branch
    %31 = sbr.rel (0) target = $region37
  $region36: #{my_rnn_forward.1} parent=0 // pred_region
    _
  $region37: #{my_rnn_forward.1} parent=0 // pred_fallthru
    _
  %v32 = vld [vmem:[%s1] sm:$0xf]
  %v33 = vld [vmem:[%s3] sm:$0x1]
  %v34 = vld [vmem:[%s5] sm:$0xff]
  %v35 = vld [vmem:[%s5 + $0x8] sm:$0xff]
  %v36 = vld [vmem:[%s5 + $0x10] sm:$0xff]
  %v37 = vld [vmem:[%s5 + $0x18] sm:$0xff]
  %v38 = vld [vmem:[%s0] sm:$0xff]
  %v40 = vperm.slane %v33, 0
  %vm42 = vcmask 31744
  %v44 = vsel %vm42, %v38, 0
  %vm46 = vcmask 1043456
  %v48 = vsel %vm46, %v32, 0
  %50 = vmatpush.msra.mxu0 0.0
  %51 = vmatpush.msra.mxu0 0.0
  %52 = vmatpush.msra.mxu0 0.0
  %53 = vmatpush.msra.mxu0 0.0
  %54 = vmatpush.msra.mxu0 0.0
  %55 = vmatpush.msra.mxu0 0.0
  %56 = vmatpush.msra.mxu0 0.0
  %57 = vmatpush.msra.mxu0 0.0
  %58 = vmatpush.msra.mxu0 0.0
  %59 = vmatpush.msra.mxu0 0.0
  %60 = vmatpush.msra.mxu0 0.0
  %61 = vmatpush.msra.mxu0 0.0
  %62 = vmatpush.msra.mxu0 0.0
  %63 = vmatpush.msra.mxu0 0.0
  %64 = vmatpush.msra.mxu0 0.0
  %65 = vmatpush.msra.mxu0 %v48
  %66 = vmatmul.f32.gmra.mxu0 %v44
  %v67 = vpop.f32.mrf.mxu0
  %v68 = vadd.f32 %v40, %v67
  %69 = vdwg.mxu0
  %v70 = vtanh.pop %v68
  %v71 = vmul.f32 %v70, 0.5
  %v72 = vadd.f32 %v71, 0.5
  %74 = vrot.lane.b32.xlu0 %v70, 64
  %v75 = vpop.permute.xlu0 %74
  %v77 = vmul.f32 %v72, %v75
  %v78 = vtanh.pop %v77
  %80 = vrot.lane.b32.xlu0 %v78, 96
  %v81 = vpop.permute.xlu0 %80
  %v83 = vmul.f32 %v72, %v81
  %v84 = vld [vmem:[%s0 + $0x8] sm:$0xff]
  %v85 = vld [vmem:[%s0 + $0x10] sm:$0xff]
  %v86 = vld [vmem:[%s0 + $0x18] sm:$0xff]
  %v87 = vld [vmem:[%s0 + $0x20] sm:$0xff]
  %v88 = vld [vmem:[%s0 + $0x28] sm:$0xff]
  %v89 = vld [vmem:[%s0 + $0x30] sm:$0xff]
  %v90 = vld [vmem:[%s0 + $0x38] sm:$0xff]
  %v92 = vsel %vm42, %v84, 0
  %v95 = vsel %vm42, %v85, 0
  %v98 = vsel %vm42, %v86, 0
  %v101 = vsel %vm42, %v87, 0
  %v104 = vsel %vm42, %v88, 0
  %v107 = vsel %vm42, %v89, 0
  %v110 = vsel %vm42, %v90, 0
  %112 = vmatpush.msra.mxu0 0.0
  %113 = vmatpush.msra.mxu0 0.0
  %114 = vmatpush.msra.mxu0 0.0
  %115 = vmatpush.msra.mxu0 0.0
  %116 = vmatpush.msra.mxu0 0.0
  %117 = vmatpush.msra.mxu0 0.0
  %118 = vmatpush.msra.mxu0 0.0
  %119 = vmatpush.msra.mxu0 0.0
  %120 = vmatpush.msra.mxu0 0.0
  %121 = vmatpush.msra.mxu0 0.0
  %122 = vmatpush.msra.mxu0 0.0
  %123 = vmatpush.msra.mxu0 0.0
  %124 = vmatpush.msra.mxu0 0.0
  %125 = vmatpush.msra.mxu0 0.0
  %126 = vmatpush.msra.mxu0 0.0
  %127 = vmatpush.msra.mxu0 %v48
  %128 = vmatmul.f32.gmra.mxu0 %v92
  %v129 = vpop.f32.mrf.mxu0
  %v130 = vadd.f32 %v40, %v129
  %131 = vmatmul.f32.gmra.mxu0 %v95
  %v132 = vpop.f32.mrf.mxu0
  %v133 = vadd.f32 %v40, %v132
  %134 = vmatmul.f32.gmra.mxu0 %v98
  %v135 = vpop.f32.mrf.mxu0
  %v136 = vadd.f32 %v40, %v135
  %137 = vmatmul.f32.gmra.mxu0 %v101
  %v138 = vpop.f32.mrf.mxu0
  %v139 = vadd.f32 %v40, %v138
  %140 = vmatmul.f32.gmra.mxu0 %v104
  %v141 = vpop.f32.mrf.mxu0
  %v142 = vadd.f32 %v40, %v141
  %143 = vmatmul.f32.gmra.mxu0 %v107
  %v144 = vpop.f32.mrf.mxu0
  %v145 = vadd.f32 %v40, %v144
  %146 = vmatmul.f32.gmra.mxu0 %v110
  %v147 = vpop.f32.mrf.mxu0
  %v148 = vadd.f32 %v40, %v147
  %149 = vdwg.mxu0
  %151 = vrot.lane.b32.xlu0 %v83, 32
  %v152 = vpop.permute.xlu0 %151
  %vm153 = vcmask 261120
  %v154 = vsel %vm153, %v152, 0
  %156 = vmatpush.msra.mxu0 0.0
  %157 = vmatpush.msra.mxu0 0.0
  %158 = vmatpush.msra.mxu0 0.0
  %159 = vmatpush.msra.mxu0 0.0
  %160 = vmatpush.msra.mxu0 0.0
  %161 = vmatpush.msra.mxu0 0.0
  %162 = vmatpush.msra.mxu0 0.0
  %163 = vmatpush.msra.mxu0 0.0
  %164 = vmatpush.msra.mxu0 0.0
  %165 = vmatpush.msra.mxu0 0.0
  %166 = vmatpush.msra.mxu0 0.0
  %167 = vmatpush.msra.mxu0 0.0
  %168 = vmatpush.msra.mxu0 %v37
  %169 = vmatpush.msra.mxu0 %v36
  %170 = vmatpush.msra.mxu0 %v35
  %171 = vmatpush.msra.mxu0 %v34
  %172 = vmatmul.f32.gmra.mxu0 %v154
  %v173 = vpop.f32.mrf.mxu0
  %v174 = vadd.f32 0.0, %v173
  %175 = vdwg.mxu0
  %v176 = vadd.f32 %v130, %v174
  %v177 = vtanh.pop %v176
  %v178 = vmul.f32 %v177, 0.5
  %v179 = vadd.f32 %v178, 0.5
  %181 = vrot.lane.b32.xlu0 %v77, 32
  %v182 = vpop.permute.xlu0 %181
  %v184 = vmul.f32 %v179, %v182
  %186 = vrot.lane.b32.xlu0 %v177, 64
  %v187 = vpop.permute.xlu0 %186
  %v189 = vmul.f32 %v179, %v187
  %191 = vrot.lane.b32.xlu0 %v189, 32
  %v192 = vpop.permute.xlu0 %191
  %v194 = vadd.f32 %v184, %v192
  %v195 = vtanh.pop %v194
  %197 = vrot.lane.b32.xlu0 %v195, 64
  %v198 = vpop.permute.xlu0 %197
  %v200 = vmul.f32 %v179, %v198
  %202 = vrot.lane.b32.xlu0 %v200, 32
  %v203 = vpop.permute.xlu0 %202
  %v204 = vsel %vm153, %v203, 0
  %206 = vmatpush.msra.mxu0 0.0
  %207 = vmatpush.msra.mxu0 0.0
  %208 = vmatpush.msra.mxu0 0.0
  %209 = vmatpush.msra.mxu0 0.0
  %210 = vmatpush.msra.mxu0 0.0
  %211 = vmatpush.msra.mxu0 0.0
  %212 = vmatpush.msra.mxu0 0.0
  %213 = vmatpush.msra.mxu0 0.0
  %214 = vmatpush.msra.mxu0 0.0
  %215 = vmatpush.msra.mxu0 0.0
  %216 = vmatpush.msra.mxu0 0.0
  %217 = vmatpush.msra.mxu0 0.0
  %218 = vmatpush.msra.mxu0 %v37
  %219 = vmatpush.msra.mxu0 %v36
  %220 = vmatpush.msra.mxu0 %v35
  %221 = vmatpush.msra.mxu0 %v34
  %222 = vmatmul.f32.gmra.mxu0 %v204
  %v223 = vpop.f32.mrf.mxu0
  %v224 = vadd.f32 0.0, %v223
  %225 = vdwg.mxu0
  %v226 = vadd.f32 %v133, %v224
  %v227 = vtanh.pop %v226
  %v228 = vmul.f32 %v227, 0.5
  %v229 = vadd.f32 %v228, 0.5
  %v230 = vmul.f32 %v229, %v194
  %232 = vrot.lane.b32.xlu0 %v227, 64
  %v233 = vpop.permute.xlu0 %232
  %v235 = vmul.f32 %v229, %v233
  %237 = vrot.lane.b32.xlu0 %v235, 32
  %v238 = vpop.permute.xlu0 %237
  %v240 = vadd.f32 %v230, %v238
  %v241 = vtanh.pop %v240
  %243 = vrot.lane.b32.xlu0 %v241, 64
  %v244 = vpop.permute.xlu0 %243
  %v246 = vmul.f32 %v229, %v244
  %248 = vrot.lane.b32.xlu0 %v246, 32
  %v249 = vpop.permute.xlu0 %248
  %v250 = vsel %vm153, %v249, 0
  %252 = vmatpush.msra.mxu0 0.0
  %253 = vmatpush.msra.mxu0 0.0
  %254 = vmatpush.msra.mxu0 0.0
  %255 = vmatpush.msra.mxu0 0.0
  %256 = vmatpush.msra.mxu0 0.0
  %257 = vmatpush.msra.mxu0 0.0
  %258 = vmatpush.msra.mxu0 0.0
  %259 = vmatpush.msra.mxu0 0.0
  %260 = vmatpush.msra.mxu0 0.0
  %261 = vmatpush.msra.mxu0 0.0
  %262 = vmatpush.msra.mxu0 0.0
  %263 = vmatpush.msra.mxu0 0.0
  %264 = vmatpush.msra.mxu0 %v37
  %265 = vmatpush.msra.mxu0 %v36
  %266 = vmatpush.msra.mxu0 %v35
  %267 = vmatpush.msra.mxu0 %v34
  %268 = vmatmul.f32.gmra.mxu0 %v250
  %v269 = vpop.f32.mrf.mxu0
  %v270 = vadd.f32 0.0, %v269
  %271 = vdwg.mxu0
  %v272 = vadd.f32 %v136, %v270
  %v273 = vtanh.pop %v272
  %v274 = vmul.f32 %v273, 0.5
  %v275 = vadd.f32 %v274, 0.5
  %v276 = vmul.f32 %v275, %v240
  %278 = vrot.lane.b32.xlu0 %v273, 64
  %v279 = vpop.permute.xlu0 %278
  %v281 = vmul.f32 %v275, %v279
  %283 = vrot.lane.b32.xlu0 %v281, 32
  %v284 = vpop.permute.xlu0 %283
  %v286 = vadd.f32 %v276, %v284
  %v287 = vtanh.pop %v286
  %289 = vrot.lane.b32.xlu0 %v287, 64
  %v290 = vpop.permute.xlu0 %289
  %v292 = vmul.f32 %v275, %v290
  %294 = vrot.lane.b32.xlu0 %v292, 32
  %v295 = vpop.permute.xlu0 %294
  %v296 = vsel %vm153, %v295, 0
  %298 = vmatpush.msra.mxu0 0.0
  %299 = vmatpush.msra.mxu0 0.0
  %300 = vmatpush.msra.mxu0 0.0
  %301 = vmatpush.msra.mxu0 0.0
  %302 = vmatpush.msra.mxu0 0.0
  %303 = vmatpush.msra.mxu0 0.0
  %304 = vmatpush.msra.mxu0 0.0
  %305 = vmatpush.msra.mxu0 0.0
  %306 = vmatpush.msra.mxu0 0.0
  %307 = vmatpush.msra.mxu0 0.0
  %308 = vmatpush.msra.mxu0 0.0
  %309 = vmatpush.msra.mxu0 0.0
  %310 = vmatpush.msra.mxu0 %v37
  %311 = vmatpush.msra.mxu0 %v36
  %312 = vmatpush.msra.mxu0 %v35
  %313 = vmatpush.msra.mxu0 %v34
  %314 = vmatmul.f32.gmra.mxu0 %v296
  %v315 = vpop.f32.mrf.mxu0
  %v316 = vadd.f32 0.0, %v315
  %317 = vdwg.mxu0
  %v318 = vadd.f32 %v139, %v316
  %v319 = vtanh.pop %v318
  %v320 = vmul.f32 %v319, 0.5
  %v321 = vadd.f32 %v320, 0.5
  %v322 = vmul.f32 %v321, %v286
  %324 = vrot.lane.b32.xlu0 %v319, 64
  %v325 = vpop.permute.xlu0 %324
  %v327 = vmul.f32 %v321, %v325
  %329 = vrot.lane.b32.xlu0 %v327, 32
  %v330 = vpop.permute.xlu0 %329
  %v332 = vadd.f32 %v322, %v330
  %v333 = vtanh.pop %v332
  %335 = vrot.lane.b32.xlu0 %v333, 64
  %v336 = vpop.permute.xlu0 %335
  %v338 = vmul.f32 %v321, %v336
  %340 = vrot.lane.b32.xlu0 %v338, 32
  %v341 = vpop.permute.xlu0 %340
  %v342 = vsel %vm153, %v341, 0
  %344 = vmatpush.msra.mxu0 0.0
  %345 = vmatpush.msra.mxu0 0.0
  %346 = vmatpush.msra.mxu0 0.0
  %347 = vmatpush.msra.mxu0 0.0
  %348 = vmatpush.msra.mxu0 0.0
  %349 = vmatpush.msra.mxu0 0.0
  %350 = vmatpush.msra.mxu0 0.0
  %351 = vmatpush.msra.mxu0 0.0
  %352 = vmatpush.msra.mxu0 0.0
  %353 = vmatpush.msra.mxu0 0.0
  %354 = vmatpush.msra.mxu0 0.0
  %355 = vmatpush.msra.mxu0 0.0
  %356 = vmatpush.msra.mxu0 %v37
  %357 = vmatpush.msra.mxu0 %v36
  %358 = vmatpush.msra.mxu0 %v35
  %359 = vmatpush.msra.mxu0 %v34
  %360 = vmatmul.f32.gmra.mxu0 %v342
  %v361 = vpop.f32.mrf.mxu0
  %v362 = vadd.f32 0.0, %v361
  %363 = vdwg.mxu0
  %v364 = vadd.f32 %v142, %v362
  %v365 = vtanh.pop %v364
  %v366 = vmul.f32 %v365, 0.5
  %v367 = vadd.f32 %v366, 0.5
  %v368 = vmul.f32 %v367, %v332
  %370 = vrot.lane.b32.xlu0 %v365, 64
  %v371 = vpop.permute.xlu0 %370
  %v373 = vmul.f32 %v367, %v371
  %375 = vrot.lane.b32.xlu0 %v373, 32
  %v376 = vpop.permute.xlu0 %375
  %v378 = vadd.f32 %v368, %v376
  %v379 = vtanh.pop %v378
  %381 = vrot.lane.b32.xlu0 %v379, 64
  %v382 = vpop.permute.xlu0 %381
  %v384 = vmul.f32 %v367, %v382
  %386 = vrot.lane.b32.xlu0 %v384, 32
  %v387 = vpop.permute.xlu0 %386
  %v388 = vsel %vm153, %v387, 0
  %390 = vmatpush.msra.mxu0 0.0
  %391 = vmatpush.msra.mxu0 0.0
  %392 = vmatpush.msra.mxu0 0.0
  %393 = vmatpush.msra.mxu0 0.0
  %394 = vmatpush.msra.mxu0 0.0
  %395 = vmatpush.msra.mxu0 0.0
  %396 = vmatpush.msra.mxu0 0.0
  %397 = vmatpush.msra.mxu0 0.0
  %398 = vmatpush.msra.mxu0 0.0
  %399 = vmatpush.msra.mxu0 0.0
  %400 = vmatpush.msra.mxu0 0.0
  %401 = vmatpush.msra.mxu0 0.0
  %402 = vmatpush.msra.mxu0 %v37
  %403 = vmatpush.msra.mxu0 %v36
  %404 = vmatpush.msra.mxu0 %v35
  %405 = vmatpush.msra.mxu0 %v34
  %406 = vmatmul.f32.gmra.mxu0 %v388
  %v407 = vpop.f32.mrf.mxu0
  %v408 = vadd.f32 0.0, %v407
  %409 = vdwg.mxu0
  %v410 = vadd.f32 %v145, %v408
  %v411 = vtanh.pop %v410
  %v412 = vmul.f32 %v411, 0.5
  %v413 = vadd.f32 %v412, 0.5
  %v414 = vmul.f32 %v413, %v378
  %416 = vrot.lane.b32.xlu0 %v411, 64
  %v417 = vpop.permute.xlu0 %416
  %v419 = vmul.f32 %v413, %v417
  %421 = vrot.lane.b32.xlu0 %v419, 32
  %v422 = vpop.permute.xlu0 %421
  %v424 = vadd.f32 %v414, %v422
  %v425 = vtanh.pop %v424
  %427 = vrot.lane.b32.xlu0 %v425, 64
  %v428 = vpop.permute.xlu0 %427
  %v430 = vmul.f32 %v413, %v428
  %432 = vrot.lane.b32.xlu0 %v430, 32
  %v433 = vpop.permute.xlu0 %432
  %v434 = vsel %vm153, %v433, 0
  %436 = vmatpush.msra.mxu0 0.0
  %437 = vmatpush.msra.mxu0 0.0
  %438 = vmatpush.msra.mxu0 0.0
  %439 = vmatpush.msra.mxu0 0.0
  %440 = vmatpush.msra.mxu0 0.0
  %441 = vmatpush.msra.mxu0 0.0
  %442 = vmatpush.msra.mxu0 0.0
  %443 = vmatpush.msra.mxu0 0.0
  %444 = vmatpush.msra.mxu0 0.0
  %445 = vmatpush.msra.mxu0 0.0
  %446 = vmatpush.msra.mxu0 0.0
  %447 = vmatpush.msra.mxu0 0.0
  %448 = vmatpush.msra.mxu0 %v37
  %449 = vmatpush.msra.mxu0 %v36
  %450 = vmatpush.msra.mxu0 %v35
  %451 = vmatpush.msra.mxu0 %v34
  %452 = vmatmul.f32.gmra.mxu0 %v434
  %v453 = vpop.f32.mrf.mxu0
  %v454 = vadd.f32 0.0, %v453
  %455 = vdwg.mxu0
  %v456 = vadd.f32 %v148, %v454
  %v457 = vtanh.pop %v456
  %v458 = vmul.f32 %v457, 0.5
  %v459 = vadd.f32 %v458, 0.5
  %v460 = vmul.f32 %v459, %v424
  %462 = vrot.lane.b32.xlu0 %v457, 64
  %v463 = vpop.permute.xlu0 %462
  %v465 = vmul.f32 %v459, %v463
  %467 = vrot.lane.b32.xlu0 %v465, 32
  %v468 = vpop.permute.xlu0 %467
  %v470 = vadd.f32 %v460, %v468
  %v471 = vtanh.pop %v470
  %473 = vrot.lane.b32.xlu0 %v471, 64
  %v474 = vpop.permute.xlu0 %473
  %v476 = vmul.f32 %v459, %v474
  %v477 = vld [vmem:[%s2] sm:$0xf]
  %v478 = vld [vmem:[%s4] sm:$0x1]
  %v480 = vperm.slane %v478, 0
  %v483 = vsel %vm46, %v477, 0
  %485 = vmatpush.msra.mxu0 0.0
  %486 = vmatpush.msra.mxu0 0.0
  %487 = vmatpush.msra.mxu0 0.0
  %488 = vmatpush.msra.mxu0 0.0
  %489 = vmatpush.msra.mxu0 0.0
  %490 = vmatpush.msra.mxu0 0.0
  %491 = vmatpush.msra.mxu0 0.0
  %492 = vmatpush.msra.mxu0 0.0
  %493 = vmatpush.msra.mxu0 0.0
  %494 = vmatpush.msra.mxu0 0.0
  %495 = vmatpush.msra.mxu0 0.0
  %496 = vmatpush.msra.mxu0 0.0
  %497 = vmatpush.msra.mxu0 0.0
  %498 = vmatpush.msra.mxu0 0.0
  %499 = vmatpush.msra.mxu0 0.0
  %500 = vmatpush.msra.mxu0 %v483
  %501 = vmatmul.f32.gmra.mxu0 %v110
  %v502 = vpop.f32.mrf.mxu0
  %v503 = vadd.f32 %v480, %v502
  %504 = vdwg.mxu0
  %v505 = vtanh.pop %v503
  %v506 = vmul.f32 %v505, 0.5
  %v507 = vadd.f32 %v506, 0.5
  %509 = vrot.lane.b32.xlu0 %v505, 64
  %v510 = vpop.permute.xlu0 %509
  %v512 = vmul.f32 %v507, %v510
  %v513 = vtanh.pop %v512
  %515 = vrot.lane.b32.xlu0 %v513, 96
  %v516 = vpop.permute.xlu0 %515
  %v518 = vmul.f32 %v507, %v516
  %v519 = vld [vmem:[%s6] sm:$0xff]
  %v520 = vld [vmem:[%s6 + $0x8] sm:$0xff]
  %v521 = vld [vmem:[%s6 + $0x10] sm:$0xff]
  %v522 = vld [vmem:[%s6 + $0x18] sm:$0xff]
  %v523 = vld [vmem:[%s7] sm:$0xff]
  %v524 = vld [vmem:[%s7 + $0x8] sm:$0xff]
  %v525 = vld [vmem:[%s7 + $0x10] sm:$0xff]
  %v526 = vld [vmem:[%s7 + $0x18] sm:$0xff]
  %528 = vrot.lane.b32.xlu0 %v518, 32
  %v529 = vpop.permute.xlu0 %528
  %v530 = vsel %vm153, %v529, 0
  %532 = vmatpush.msra.mxu0 0.0
  %533 = vmatpush.msra.mxu0 0.0
  %534 = vmatpush.msra.mxu0 0.0
  %535 = vmatpush.msra.mxu0 0.0
  %536 = vmatpush.msra.mxu0 0.0
  %537 = vmatpush.msra.mxu0 0.0
  %538 = vmatpush.msra.mxu0 0.0
  %539 = vmatpush.msra.mxu0 0.0
  %540 = vmatpush.msra.mxu0 0.0
  %541 = vmatpush.msra.mxu0 0.0
  %542 = vmatpush.msra.mxu0 0.0
  %543 = vmatpush.msra.mxu0 0.0
  %544 = vmatpush.msra.mxu0 %v526
  %545 = vmatpush.msra.mxu0 %v525
  %546 = vmatpush.msra.mxu0 %v524
  %547 = vmatpush.msra.mxu0 %v523
  %548 = vmatmul.f32.gmra.mxu0 %v530
  %v549 = vpop.f32.mrf.mxu0
  %v550 = vadd.f32 0.0, %v549
  %551 = vdwg.mxu0
  %553 = vrot.lane.b32.xlu0 %v476, 32
  %v554 = vpop.permute.xlu0 %553
  %v555 = vsel %vm153, %v554, 0
  %557 = vmatpush.msra.mxu0 0.0
  %558 = vmatpush.msra.mxu0 0.0
  %559 = vmatpush.msra.mxu0 0.0
  %560 = vmatpush.msra.mxu0 0.0
  %561 = vmatpush.msra.mxu0 0.0
  %562 = vmatpush.msra.mxu0 0.0
  %563 = vmatpush.msra.mxu0 0.0
  %564 = vmatpush.msra.mxu0 0.0
  %565 = vmatpush.msra.mxu0 0.0
  %566 = vmatpush.msra.mxu0 0.0
  %567 = vmatpush.msra.mxu0 0.0
  %568 = vmatpush.msra.mxu0 0.0
  %569 = vmatpush.msra.mxu0 %v522
  %570 = vmatpush.msra.mxu0 %v521
  %571 = vmatpush.msra.mxu0 %v520
  %572 = vmatpush.msra.mxu0 %v519
  %573 = vmatmul.f32.gmra.mxu0 %v555
  %v574 = vpop.f32.mrf.mxu0
  %v575 = vadd.f32 %v550, %v574
  %576 = vdwg.mxu0
  %v577 = vld [vmem:[%s8] sm:$0x1]
  %v579 = vperm.slane %v577, 0
  %v581 = vadd.f32 %v575, %v579
  %vm582 = vcmask 15360
  %583 = vst.msk [vmem:[%s9] sm:$0xff] %vm582, %v581
  // Predicated region
  $region38: #{my_rnn_forward.1} parent=0 // pred_check
    _
  $region39: #{my_rnn_forward.1} parent=0 // pred_check_branch
    %585 = sbr.rel (0) target = $region41
  $region40: #{my_rnn_forward.1} parent=0 // pred_region
    _
  $region41: #{my_rnn_forward.1} parent=0 // pred_fallthru
    _
  // Predicated region
  $region42: #{my_rnn_forward.1} parent=0 // pred_check
    _
  $region43: #{my_rnn_forward.1} parent=0 // pred_check_branch
    %587 = sbr.rel (0) target = $region45
  $region44: #{my_rnn_forward.1} parent=0 // pred_region
    _
  $region45: #{my_rnn_forward.1} parent=0 // pred_fallthru
    _

</llo_original>
